<compile_context>
chip_gen: v7x
topology: tpu7x:2x2x1
jax: 0.10.0
libtpu: 0.0.40
codegen_flags: <defaults>
</compile_context>

<pallas_src>
import jax
import jax.numpy as jnp
from jax.experimental import pallas as pl
from jax.experimental.pallas import tpu as pltpu


def _make_mlp_kernel(n_layers, final_act, act_fn):
    def kernel(x_ref, *rest):
        o_ref = rest[-1]
        params = rest[:-1]                      # w1, b1, w2, b2, ...
        h = x_ref[...].astype(jnp.float32)      # (C_in, t_hw)  channels x tokens
        for li in range(n_layers):
            w = params[2 * li][...]             # (H_li, H_{li-1})
            b = params[2 * li + 1][...]         # (H_li, 1)  lane-broadcast bias
            h = jnp.dot(w, h, preferred_element_type=jnp.float32) + b
            if li < n_layers - 1 or final_act:
                h = act_fn(h)
        o_ref[...] = h.astype(o_ref.dtype)      # (H_out, t_hw) -> NCHW block
    return kernel


def _choose_thw(HW, B, per_token_bytes, budget=12 * 1024 * 1024, max_tile=2048):
    """Largest lane-dense spatial tile that divides HW under the VMEM budget,
    preferring a grid with >= 8 steps so both megacore TCs get work."""
    if HW % 128 != 0:
        # Full-extent block is always legal for the last block dim.
        return HW
    cap = max(128, min(max_tile, budget // max(per_token_bytes, 1)))
    cands = [t for t in range(128, min(HW, cap) + 1, 128) if HW % t == 0]
    if not cands:
        return 128
    with_par = [t for t in cands if B * (HW // t) >= 8]
    return max(with_par) if with_par else max(cands)


def mlp_forward(x, weights, biases, *, final_act=True, activation="relu"):
    """x: (B, C, H, W).  weights[i]: (H_i, H_{i-1}) (nn.Linear layout),
    biases[i]: (H_i,).  Returns (B, H_last, H, W) matching the PyTorch module."""
    B, C, H, W = x.shape
    HW = H * W
    dims = [int(w.shape[0]) for w in weights]
    n_layers = len(weights)
    H_out = dims[-1]

    act_fn = {
        "relu": lambda v: jnp.maximum(v, 0.0),
        "tanh": jnp.tanh,
        "sigmoid": jax.nn.sigmoid,
    }[activation]

    x3 = x.reshape(B, C, HW)                      # native NCHW, no transpose
    b_cols = [b.reshape(-1, 1).astype(jnp.float32) for b in biases]
    w_f32 = [w.astype(jnp.float32) for w in weights]

    # Per-token f32 bytes: double-buffered input + output blocks + layer temps.
    per_token = 4 * (2 * C + 2 * H_out + sum(dims))
    t_hw = _choose_thw(HW, B, per_token)
    grid = (B, HW // t_hw)

    kernel = _make_mlp_kernel(n_layers, final_act, act_fn)

    in_specs = [pl.BlockSpec((pl.Squeezed(), C, t_hw), lambda b, j: (b, 0, j))]
    operands = [x3]
    for w, bc in zip(w_f32, b_cols):
        in_specs.append(pl.BlockSpec(w.shape, lambda b, j: (0, 0)))
        in_specs.append(pl.BlockSpec(bc.shape, lambda b, j: (0, 0)))
        operands.append(w)
        operands.append(bc)

    out_spec = pl.BlockSpec((pl.Squeezed(), H_out, t_hw), lambda b, j: (b, 0, j))

    layer_dims = list(zip([C] + dims[:-1], dims))
    flops = 2 * B * HW * sum(di * do for di, do in layer_dims)
    bytes_accessed = 4 * (B * HW * C + B * HW * H_out
                          + sum(int(w.size) for w in weights)
                          + sum(int(b.size) for b in biases))
    transcendentals = B * HW * sum(dims) if activation in ("tanh", "sigmoid") else 0

    y = pl.pallas_call(
        kernel,
        out_shape=jax.ShapeDtypeStruct((B, H_out, HW), x.dtype),
        grid_spec=pltpu.PrefetchScalarGridSpec(
            num_scalar_prefetch=0,
            grid=grid,
            in_specs=in_specs,
            out_specs=out_spec,
        ),
        compiler_params=pltpu.CompilerParams(
            dimension_semantics=("parallel", "parallel"),
            vmem_limit_bytes=64 * 1024 * 1024),
        cost_estimate=pl.CostEstimate(
            flops=flops,
            transcendentals=transcendentals,
            bytes_accessed=bytes_accessed),
    )(*operands)

    # Kernel output is already NCHW-contiguous (B, H_out, H*W).
    return y.reshape(B, H_out, H, W)


def _reference(x, weights, biases, *, final_act=True, activation="relu"):
    act = {"relu": lambda v: jnp.maximum(v, 0.0),
           "tanh": jnp.tanh,
           "sigmoid": jax.nn.sigmoid}[activation]
    B, C, H, W = x.shape
    h = jnp.transpose(x.reshape(B, C, H * W), (0, 2, 1))   # (B, HW, C)
    n = len(weights)
    for i, (w, b) in enumerate(zip(weights, biases)):
        h = h @ w.T + b
        if i < n - 1 or final_act:
            h = act(h)
    return jnp.transpose(h, (0, 2, 1)).reshape(B, -1, H, W)


if __name__ == "__main__":
    key = jax.random.PRNGKey(0)
    B, C, H, W = 2, 4, 16, 16
    hidden_dims = (128, 128)          # module defaults
    final_act = True
    activation = "relu"

    keys = jax.random.split(key, 1 + 2 * len(hidden_dims))
    x = jax.random.normal(keys[0], (B, C, H, W), dtype=jnp.float32)

    # nn.Linear init: U(-1/sqrt(fan_in), 1/sqrt(fan_in)), deterministic keys.
    weights, biases = [], []
    last = C
    for li, nh in enumerate(hidden_dims):
        bound = 1.0 / (last ** 0.5)
        kw, kb = keys[1 + 2 * li], keys[2 + 2 * li]
        weights.append(jax.random.uniform(kw, (nh, last), jnp.float32, -bound, bound))
        biases.append(jax.random.uniform(kb, (nh,), jnp.float32, -bound, bound))
        last = nh

    out = mlp_forward(x, weights, biases, final_act=final_act, activation=activation)
    out = jax.block_until_ready(out)

    ref = _reference(x, weights, biases, final_act=final_act, activation=activation)
    assert out.shape == (B, hidden_dims[-1], H, W), out.shape
    assert jnp.allclose(out, ref, atol=1e-4, rtol=1e-4), \
        float(jnp.max(jnp.abs(out - ref)))
    print("KERNEL_OK")
</pallas_src>

<mosaic_0001>
module attributes {stable_mosaic.version = 11 : i64} {
  func.func @kernel(%arg0: i32, %arg1: i32, %arg2: memref<1x4x256xf32, #tpu.memory_space<vmem>>, %arg3: memref<128x4xf32, #tpu.memory_space<vmem>>, %arg4: memref<128x1xf32, #tpu.memory_space<vmem>>, %arg5: memref<128x128xf32, #tpu.memory_space<vmem>>, %arg6: memref<128x1xf32, #tpu.memory_space<vmem>>, %arg7: memref<1x128x256xf32, #tpu.memory_space<vmem>>) attributes {dimension_semantics = [#tpu.dimension_semantics<parallel>, #tpu.dimension_semantics<parallel>], iteration_bounds = array<i64: 2, 1>, scalar_prefetch = 0 : i64, scratch_operands = 0 : i64, tpu.core_type = #tpu.core_type<tc>, window_params = [{transform_indices = @transform_0, window_bounds = array<i64: 1, 4, 256>}, {pipeline_mode = #tpu.pipeline_mode<synchronous>, transform_indices = @transform_1, window_bounds = array<i64: 128, 4>}, {pipeline_mode = #tpu.pipeline_mode<synchronous>, transform_indices = @transform_2, window_bounds = array<i64: 128, 1>}, {pipeline_mode = #tpu.pipeline_mode<synchronous>, transform_indices = @transform_3, window_bounds = array<i64: 128, 128>}, {pipeline_mode = #tpu.pipeline_mode<synchronous>, transform_indices = @transform_4, window_bounds = array<i64: 128, 1>}, {transform_indices = @transform_5, window_bounds = array<i64: 1, 128, 256>}]} {
    %c0 = arith.constant 0 : index
    %c0_0 = arith.constant 0 : index
    %c0_1 = arith.constant 0 : index
    %0 = vector.load %arg2[%c0, %c0_0, %c0_1] : memref<1x4x256xf32, #tpu.memory_space<vmem>>, vector<1x4x256xf32>
    %1 = vector.shape_cast %0 : vector<1x4x256xf32> to vector<4x256xf32>
    %c0_2 = arith.constant 0 : index
    %c0_3 = arith.constant 0 : index
    %2 = vector.load %arg3[%c0_2, %c0_3] : memref<128x4xf32, #tpu.memory_space<vmem>>, vector<128x4xf32>
    %c0_4 = arith.constant 0 : index
    %c0_5 = arith.constant 0 : index
    %3 = vector.load %arg4[%c0_4, %c0_5] : memref<128x1xf32, #tpu.memory_space<vmem>>, vector<128x1xf32>
    %cst = arith.constant dense<0.000000e+00> : vector<128x256xf32>
    %4 = tpu.matmul %2, %1, %cst {dimension_numbers = #tpu.dot_dimension_numbers<[1], [0], [0], [1], [0, 0, 1, 1], [], []>} : vector<128x4xf32>, vector<4x256xf32>, vector<128x256xf32> -> vector<128x256xf32>
    %5 = vector.broadcast %3 : vector<128x1xf32> to vector<128x256xf32>
    %6 = arith.addf %4, %5 : vector<128x256xf32>
    %cst_6 = arith.constant 0.000000e+00 : f32
    %7 = vector.broadcast %cst_6 : f32 to vector<128x256xf32>
    %8 = arith.maximumf %6, %7 : vector<128x256xf32>
    %c0_7 = arith.constant 0 : index
    %c0_8 = arith.constant 0 : index
    %9 = vector.load %arg5[%c0_7, %c0_8] : memref<128x128xf32, #tpu.memory_space<vmem>>, vector<128x128xf32>
    %c0_9 = arith.constant 0 : index
    %c0_10 = arith.constant 0 : index
    %10 = vector.load %arg6[%c0_9, %c0_10] : memref<128x1xf32, #tpu.memory_space<vmem>>, vector<128x1xf32>
    %cst_11 = arith.constant dense<0.000000e+00> : vector<128x256xf32>
    %11 = tpu.matmul %9, %8, %cst_11 {dimension_numbers = #tpu.dot_dimension_numbers<[1], [0], [0], [1], [0, 0, 1, 1], [], []>} : vector<128x128xf32>, vector<128x256xf32>, vector<128x256xf32> -> vector<128x256xf32>
    %12 = vector.broadcast %10 : vector<128x1xf32> to vector<128x256xf32>
    %13 = arith.addf %11, %12 : vector<128x256xf32>
    %cst_12 = arith.constant 0.000000e+00 : f32
    %14 = vector.broadcast %cst_12 : f32 to vector<128x256xf32>
    %15 = arith.maximumf %13, %14 : vector<128x256xf32>
    %c0_13 = arith.constant 0 : index
    %c0_14 = arith.constant 0 : index
    %c0_15 = arith.constant 0 : index
    %16 = vector.load %arg7[%c0_13, %c0_14, %c0_15] : memref<1x128x256xf32, #tpu.memory_space<vmem>>, vector<1x128x256xf32>
    %17 = vector.shape_cast %16 : vector<1x128x256xf32> to vector<128x256xf32>
    %18 = vector.shape_cast %15 : vector<128x256xf32> to vector<1x128x256xf32>
    tpu.vector_store %arg7[%c0_13, %c0_14, %c0_15], %18 {strides = array<i32>} : memref<1x128x256xf32, #tpu.memory_space<vmem>>, vector<1x128x256xf32>,
    return
  }
  func.func @transform_0(%arg0: i32, %arg1: i32) -> (i32, i32, i32) {
    %c0_i32 = arith.constant 0 : i32
    %c0_i32_0 = arith.constant 0 : i32
    return %arg0, %c0_i32, %arg1 : i32, i32, i32
  }
  func.func @transform_1(%arg0: i32, %arg1: i32) -> (i32, i32) {
    %c0_i32 = arith.constant 0 : i32
    %c0_i32_0 = arith.constant 0 : i32
    %c0_i32_1 = arith.constant 0 : i32
    return %c0_i32, %c0_i32_0 : i32, i32
  }
  func.func @transform_2(%arg0: i32, %arg1: i32) -> (i32, i32) {
    %c0_i32 = arith.constant 0 : i32
    %c0_i32_0 = arith.constant 0 : i32
    %c0_i32_1 = arith.constant 0 : i32
    return %c0_i32, %c0_i32_0 : i32, i32
  }
  func.func @transform_3(%arg0: i32, %arg1: i32) -> (i32, i32) {
    %c0_i32 = arith.constant 0 : i32
    %c0_i32_0 = arith.constant 0 : i32
    %c0_i32_1 = arith.constant 0 : i32
    return %c0_i32, %c0_i32_0 : i32, i32
  }
  func.func @transform_4(%arg0: i32, %arg1: i32) -> (i32, i32) {
    %c0_i32 = arith.constant 0 : i32
    %c0_i32_0 = arith.constant 0 : i32
    %c0_i32_1 = arith.constant 0 : i32
    return %c0_i32, %c0_i32_0 : i32, i32
  }
  func.func @transform_5(%arg0: i32, %arg1: i32) -> (i32, i32, i32) {
    %c0_i32 = arith.constant 0 : i32
    %c0_i32_0 = arith.constant 0 : i32
    return %arg0, %c0_i32, %arg1 : i32, i32, i32
  }
}

</mosaic_0001>

<llo_original>
// kernel: tpu_custom_call.1
$region0: #{tpu_custom_call.1}
  #allocation0 [shape = 'u32[]', space=smem, size = 0x4, offset = 0x4, fixed_abs, tag = 'smem constant byte address 0x4 - core index']
  #allocation1 [shape = 'u32[144,128]{1,0:T(1,128)}', space=vmem, size = 0x12000, scoped, tag = 'internal scratch']
  %s0 = inlined_call_operand.hbm [shape: f32[2,4,256], index: 0, kind: input, shape index: {}]
  %s1 = inlined_call_operand.hbm [shape: f32[128,4], index: 1, kind: input, shape index: {}]
  %s2 = inlined_call_operand.hbm [shape: f32[128,1], index: 2, kind: input, shape index: {}]
  %s3 = inlined_call_operand.hbm [shape: f32[128,128], index: 3, kind: input, shape index: {}]
  %s4 = inlined_call_operand.hbm [shape: f32[128,1], index: 4, kind: input, shape index: {}]
  %s5 = inlined_call_operand.hbm [shape: f32[2,128,256], index: 5, kind: output, shape index: {}]
  %s6 = sld [smem:[#allocation0]]
  $region73: #{tpu_custom_call.1} parent=0
    _
  %s8 = ssub.s32 1, %s6
  %s9 = scalar_select 0, %s8, %s6
  $region1: #{tpu_custom_call.1} parent=0
    #allocation2 [shape = 'u8[8192]{0}', space=vmem, size = 0x2000, scoped, tag = 'input window, operand 0']
    #allocation3 [shape = 's32[2]{0}', space=sflag, size = 0x8, scoped, tag = 'scoped memory for tpu_custom_call.1']
    #allocation4 [shape = 's32[2]{0}', space=sflag, size = 0x8, scoped, tag = 'scoped memory for tpu_custom_call.1']
    #allocation5 [shape = 'u8[65536]{0}', space=vmem, size = 0x10000, scoped, tag = 'input window, operand 1, single buffered']
    #allocation6 [shape = 's32[1]{0}', space=sflag, size = 0x4, scoped, tag = 'scoped memory for tpu_custom_call.1']
    #allocation7 [shape = 'u8[65536]{0}', space=vmem, size = 0x10000, scoped, tag = 'input window, operand 2, single buffered']
    #allocation8 [shape = 'u8[65536]{0}', space=vmem, size = 0x10000, scoped, tag = 'input window, operand 3, single buffered']
    #allocation9 [shape = 's32[1]{0}', space=sflag, size = 0x4, scoped, tag = 'scoped memory for tpu_custom_call.1']
    #allocation10 [shape = 'u8[65536]{0}', space=vmem, size = 0x10000, scoped, tag = 'input window, operand 4, single buffered']
    #allocation11 [shape = 'u8[262144]{0}', space=vmem, size = 0x40000, scoped, tag = 'output window, operand 0']
    %10 = vsyncpa [#allocation3], 0
    %s11 = scalar_lea.sflag [#allocation3], 1
    %12 = vsyncpa %s11, 0
    %13 = vsyncpa [#allocation6], 0
    %14 = vsyncpa [#allocation9], 0
    %15 = vsyncpa [#allocation4], 0
    %s16 = scalar_lea.sflag [#allocation4], 1
    %17 = vsyncpa %s16, 0
    loop: start=0, step=1, limit=4
    $region2: #{tpu_custom_call.1} parent=1 // loop_pre_header
      _
    $region3: #{tpu_custom_call.1} parent=1 // loop_header
      %s19 = sphi 0, %s23
      %p20 = scmp.ge.s32.totalorder %s19, 4
      %s26 = sphi 0, %s38
      %s27 = sphi 0, %s34
      %s28 = sphi 0, %s26
      %s29 = sphi 0, %s27
      %s30 = sphi 0, %s28
      %s31 = sphi 0, %s29
      %s43 = sphi 0, %s45
      %s46 = sphi 0, %s43
      %s47 = sphi 0, %s46
      %s63 = sphi 0, %s47
      %s67 = sphi 0, %s67
      %s69 = sphi 0, %s67
      %s70 = sphi 0, %s69
      %s84 = sphi 0, %s70
      %s88 = sphi 0, %s88
      %s90 = sphi 0, %s88
      %s91 = sphi 0, %s90
      %s105 = sphi 0, %s91
      %s109 = sphi 0, %s109
      %s111 = sphi 0, %s109
      %s112 = sphi 0, %s111
      %s126 = sphi 0, %s112
      %s130 = sphi 0, %s130
      %s132 = sphi 0, %s130
      %s133 = sphi 0, %s132
      %s147 = sphi 0, %s133
      %s155 = sphi 0, %s157
      %s158 = sphi 0, %s155
      %s159 = sphi 0, %s158
      %s175 = sphi 0, %s159
    $region4: #{tpu_custom_call.1} parent=1 // loop_header_branch
      %22 = sbr.rel (%p20) target = $region8
    $region5: #{tpu_custom_call.1} parent=1 // loop_body
      %s24 = ssub.s32 %s19, 1
      %s25 = ssub.s32 %s19, 2
      %s32 = sadd.s32 1, %s27
      %p33 = scmp.ge.s32.totalorder %s32, 1
      %s34 = scalar_select %p33, 0, %s32
      %s35 = sadd.s32 1, %s26
      %s36 = scalar_select %p33, %s35, %s26
      %p37 = scmp.ge.s32.totalorder %s36, 2
      %s38 = scalar_select %p37, 0, %s36
      %s39 = ssub.s32 %s26, %s38
      %s40 = ssub.s32 %s27, %s34
      %s41 = sor.u32 %s39, %s40
      %p42 = scmp.eq.s32.totalorder %s41, 0
      %s44 = sadd.s32 %s43, 1
      %s45 = scalar_select %p42, %s43, %s44
      %p48 = pneg %p42
      %p49 = scmp.eq.s32.totalorder %s19, 1
      %p50 = por %p48, %p49
      %p51 = scmp.ne.s32.totalorder %s43, %s46
      %p52 = scmp.eq.s32.totalorder %s19, 0
      %p53 = por %p51, %p52
      %p54 = scmp.ne.s32.totalorder %s43, %s46
      %p55 = scmp.eq.s32.totalorder %s24, 1
      %p56 = por %p54, %p55
      %p57 = scmp.ne.s32.totalorder %s46, %s47
      %p58 = scmp.eq.s32.totalorder %s24, 0
      %p59 = por %p57, %p58
      %p60 = scmp.ne.s32.totalorder %s46, %s47
      %p61 = scmp.eq.s32.totalorder %s25, 1
      %p62 = por %p60, %p61
      %p64 = scmp.ne.s32.totalorder %s47, %s63
      %p65 = scmp.eq.s32.totalorder %s25, 0
      %p66 = por %p64, %p65
      %s68 = sadd.s32 %s67, 1
      %p71 = scmp.eq.s32.totalorder %s19, 1
      %p72 = scmp.ne.s32.totalorder %s67, %s69
      %p73 = scmp.eq.s32.totalorder %s19, 0
      %p74 = por %p72, %p73
      %p75 = scmp.ne.s32.totalorder %s67, %s69
      %p76 = scmp.eq.s32.totalorder %s24, 1
      %p77 = por %p75, %p76
      %p78 = scmp.ne.s32.totalorder %s69, %s70
      %p79 = scmp.eq.s32.totalorder %s24, 0
      %p80 = por %p78, %p79
      %p81 = scmp.ne.s32.totalorder %s69, %s70
      %p82 = scmp.eq.s32.totalorder %s25, 1
      %p83 = por %p81, %p82
      %p85 = scmp.ne.s32.totalorder %s70, %s84
      %p86 = scmp.eq.s32.totalorder %s25, 0
      %p87 = por %p85, %p86
      %s89 = sadd.s32 %s88, 1
      %p92 = scmp.eq.s32.totalorder %s19, 1
      %p93 = scmp.ne.s32.totalorder %s88, %s90
      %p94 = scmp.eq.s32.totalorder %s19, 0
      %p95 = por %p93, %p94
      %p96 = scmp.ne.s32.totalorder %s88, %s90
      %p97 = scmp.eq.s32.totalorder %s24, 1
      %p98 = por %p96, %p97
      %p99 = scmp.ne.s32.totalorder %s90, %s91
      %p100 = scmp.eq.s32.totalorder %s24, 0
      %p101 = por %p99, %p100
      %p102 = scmp.ne.s32.totalorder %s90, %s91
      %p103 = scmp.eq.s32.totalorder %s25, 1
      %p104 = por %p102, %p103
      %p106 = scmp.ne.s32.totalorder %s91, %s105
      %p107 = scmp.eq.s32.totalorder %s25, 0
      %p108 = por %p106, %p107
      %s110 = sadd.s32 %s109, 1
      %p113 = scmp.eq.s32.totalorder %s19, 1
      %p114 = scmp.ne.s32.totalorder %s109, %s111
      %p115 = scmp.eq.s32.totalorder %s19, 0
      %p116 = por %p114, %p115
      %p117 = scmp.ne.s32.totalorder %s109, %s111
      %p118 = scmp.eq.s32.totalorder %s24, 1
      %p119 = por %p117, %p118
      %p120 = scmp.ne.s32.totalorder %s111, %s112
      %p121 = scmp.eq.s32.totalorder %s24, 0
      %p122 = por %p120, %p121
      %p123 = scmp.ne.s32.totalorder %s111, %s112
      %p124 = scmp.eq.s32.totalorder %s25, 1
      %p125 = por %p123, %p124
      %p127 = scmp.ne.s32.totalorder %s112, %s126
      %p128 = scmp.eq.s32.totalorder %s25, 0
      %p129 = por %p127, %p128
      %s131 = sadd.s32 %s130, 1
      %p134 = scmp.eq.s32.totalorder %s19, 1
      %p135 = scmp.ne.s32.totalorder %s130, %s132
      %p136 = scmp.eq.s32.totalorder %s19, 0
      %p137 = por %p135, %p136
      %p138 = scmp.ne.s32.totalorder %s130, %s132
      %p139 = scmp.eq.s32.totalorder %s24, 1
      %p140 = por %p138, %p139
      %p141 = scmp.ne.s32.totalorder %s132, %s133
      %p142 = scmp.eq.s32.totalorder %s24, 0
      %p143 = por %p141, %p142
      %p144 = scmp.ne.s32.totalorder %s132, %s133
      %p145 = scmp.eq.s32.totalorder %s25, 1
      %p146 = por %p144, %p145
      %p148 = scmp.ne.s32.totalorder %s133, %s147
      %p149 = scmp.eq.s32.totalorder %s25, 0
      %p150 = por %p148, %p149
      %s151 = ssub.s32 %s26, %s38
      %s152 = ssub.s32 %s27, %s34
      %s153 = sor.u32 %s151, %s152
      %p154 = scmp.eq.s32.totalorder %s153, 0
      %s156 = sadd.s32 %s155, 1
      %s157 = scalar_select %p154, %s155, %s156
      %p160 = pneg %p154
      %p161 = scmp.eq.s32.totalorder %s19, 1
      %p162 = por %p160, %p161
      %p163 = scmp.ne.s32.totalorder %s155, %s158
      %p164 = scmp.eq.s32.totalorder %s19, 0
      %p165 = por %p163, %p164
      %p166 = scmp.ne.s32.totalorder %s155, %s158
      %p167 = scmp.eq.s32.totalorder %s24, 1
      %p168 = por %p166, %p167
      %p169 = scmp.ne.s32.totalorder %s158, %s159
      %p170 = scmp.eq.s32.totalorder %s24, 0
      %p171 = por %p169, %p170
      %p172 = scmp.ne.s32.totalorder %s158, %s159
      %p173 = scmp.eq.s32.totalorder %s25, 1
      %p174 = por %p172, %p173
      %p176 = scmp.ne.s32.totalorder %s159, %s175
      %p177 = scmp.eq.s32.totalorder %s25, 0
      %p178 = por %p176, %p177
      %p179 = scmp.le.s32.totalorder 1, %s19
      %p180 = scmp.lt.s32.totalorder %s19, 3
      %p181 = pnand %p179, %p180
      %p182 = pneg %p181
      // Predicated region
      $region9: #{tpu_custom_call.1} parent=5 // pred_check
        _
      $region10: #{tpu_custom_call.1} parent=5 // pred_check_branch
        %184 = sbr.rel (%p181) target = $region12
      $region11: #{tpu_custom_call.1} parent=5 // pred_region
        %s185 = ssub.s32 %s19, 1
        // Predicated region
        $region13: #{tpu_custom_call.1} parent=11 // pred_check
          %p186 = pneg %p80
        $region14: #{tpu_custom_call.1} parent=11 // pred_check_branch
          %188 = sbr.rel (%p186) target = $region16
        $region15: #{tpu_custom_call.1} parent=11 // pred_region
          %s190 = ssub.s32 2048, 2048
          %191 = vsyncadd [#allocation6], %s190
          %s192 = sshll.u32 [#allocation5], 4
          %s193 = int_to_ptr.vmem [resolvable:$true] %s192
          %198 = dma.hbm_to_vmem [thread:$0]  %s1, 2048, %s193, [#allocation6], 128, 128, 8
        $region16: #{tpu_custom_call.1} parent=11 // pred_fallthru
          _
        // Predicated region
        $region17: #{tpu_custom_call.1} parent=11 // pred_check
          %p199 = pneg %p101
        $region18: #{tpu_custom_call.1} parent=11 // pred_check_branch
          %201 = sbr.rel (%p199) target = $region20
        $region19: #{tpu_custom_call.1} parent=11 // pred_region
          %s203 = ssub.s32 2048, 2048
          %204 = vsyncadd [#allocation6], %s203
          %s205 = sshll.u32 [#allocation7], 4
          %s206 = int_to_ptr.vmem [resolvable:$true] %s205
          %211 = dma.hbm_to_vmem [thread:$0]  %s2, 2048, %s206, [#allocation6], 128, 128, 8
        $region20: #{tpu_custom_call.1} parent=11 // pred_fallthru
          _
        // Predicated region
        $region21: #{tpu_custom_call.1} parent=11 // pred_check
          %p212 = pneg %p122
        $region22: #{tpu_custom_call.1} parent=11 // pred_check_branch
          %214 = sbr.rel (%p212) target = $region24
        $region23: #{tpu_custom_call.1} parent=11 // pred_region
          %s216 = ssub.s32 2048, 2048
          %217 = vsyncadd [#allocation9], %s216
          %s218 = sshll.u32 [#allocation8], 4
          %s219 = int_to_ptr.vmem [resolvable:$true] %s218
          %224 = dma.hbm_to_vmem [thread:$0]  %s3, 2048, %s219, [#allocation9], 128, 128, 8
        $region24: #{tpu_custom_call.1} parent=11 // pred_fallthru
          _
        // Predicated region
        $region25: #{tpu_custom_call.1} parent=11 // pred_check
          %p225 = pneg %p143
        $region26: #{tpu_custom_call.1} parent=11 // pred_check_branch
          %227 = sbr.rel (%p225) target = $region28
        $region27: #{tpu_custom_call.1} parent=11 // pred_region
          %s229 = ssub.s32 2048, 2048
          %230 = vsyncadd [#allocation9], %s229
          %s231 = sshll.u32 [#allocation10], 4
          %s232 = int_to_ptr.vmem [resolvable:$true] %s231
          %237 = dma.hbm_to_vmem [thread:$0]  %s4, 2048, %s232, [#allocation9], 128, 128, 8
        $region28: #{tpu_custom_call.1} parent=11 // pred_fallthru
          _
      $region12: #{tpu_custom_call.1} parent=5 // pred_fallthru
        _
      %p238 = scmp.lt.s32.totalorder %s19, 2
      // Predicated region
      $region29: #{tpu_custom_call.1} parent=5 // pred_check
        %p239 = pneg %p238
      $region30: #{tpu_custom_call.1} parent=5 // pred_check_branch
        %241 = sbr.rel (%p239) target = $region32
      $region31: #{tpu_custom_call.1} parent=5 // pred_region
        // Predicated region
        $region33: #{tpu_custom_call.1} parent=31 // pred_check
          %p242 = pneg %p53
        $region34: #{tpu_custom_call.1} parent=31 // pred_check_branch
          %244 = sbr.rel (%p242) target = $region36
        $region35: #{tpu_custom_call.1} parent=31 // pred_region
          %s245 = sand.u32 %s43, 1
          %s246 = scalar_lea.sflag [#allocation3], %s245
          %s247 = sand.u32 %s43, 1
          %s248 = smul.addr %s247, 8
          %s249 = scalar_lea.vmem [#allocation2], %s248
          %s250 = smul.u32 2, %s27
          %s252 = ssub.s32 128, 128
          %253 = vsyncadd %s246, %s252
          %s254 = smul.addr %s26, 2
          %s255 = sadd.s32 %s250, %s254
          %s256 = smul.addr %s255, 64
          %s257 = scalar_lea.hbm %s0, %s256
          %s259 = sshll.u32 %s249, 4
          %s260 = int_to_ptr.vmem [resolvable:$true] %s259
          %262 = dma.hbm_to_vmem [thread:$0]  %s257, 128, %s260, %s246
        $region36: #{tpu_custom_call.1} parent=31 // pred_fallthru
          _
      $region32: #{tpu_custom_call.1} parent=5 // pred_fallthru
        _
      %p263 = scmp.le.s32.totalorder 1, %s19
      %p264 = scmp.lt.s32.totalorder %s19, 3
      %p265 = pnand %p263, %p264
      %p266 = pneg %p265
      // Predicated region
      $region37: #{tpu_custom_call.1} parent=5 // pred_check
        _
      $region38: #{tpu_custom_call.1} parent=5 // pred_check_branch
        %268 = sbr.rel (%p265) target = $region40
      $region39: #{tpu_custom_call.1} parent=5 // pred_region
        %s269 = ssub.s32 %s19, 1
        %s270 = sand.u32 %s46, 1
        %s271 = scalar_lea.sflag [#allocation3], %s270
        %s272 = sand.u32 %s46, 1
        %s273 = smul.addr %s272, 8
        %s274 = scalar_lea.vmem [#allocation2], %s273
        // Predicated region
        $region41: #{tpu_custom_call.1} parent=39 // pred_check
          %p275 = pneg %p59
        $region42: #{tpu_custom_call.1} parent=39 // pred_check_branch
          %277 = sbr.rel (%p275) target = $region44
        $region43: #{tpu_custom_call.1} parent=39 // pred_region
          %278 = dma.done %s271, 128
        $region44: #{tpu_custom_call.1} parent=39 // pred_fallthru
          _
        // Predicated region
        $region45: #{tpu_custom_call.1} parent=39 // pred_check
          %p279 = pneg %p80
        $region46: #{tpu_custom_call.1} parent=39 // pred_check_branch
          %281 = sbr.rel (%p279) target = $region48
        $region47: #{tpu_custom_call.1} parent=39 // pred_region
          %282 = dma.done [#allocation6], 2048
        $region48: #{tpu_custom_call.1} parent=39 // pred_fallthru
          _
        // Predicated region
        $region49: #{tpu_custom_call.1} parent=39 // pred_check
          %p283 = pneg %p101
        $region50: #{tpu_custom_call.1} parent=39 // pred_check_branch
          %285 = sbr.rel (%p283) target = $region52
        $region51: #{tpu_custom_call.1} parent=39 // pred_region
          %286 = dma.done [#allocation6], 2048
        $region52: #{tpu_custom_call.1} parent=39 // pred_fallthru
          _
        // Predicated region
        $region53: #{tpu_custom_call.1} parent=39 // pred_check
          %p287 = pneg %p122
        $region54: #{tpu_custom_call.1} parent=39 // pred_check_branch
          %289 = sbr.rel (%p287) target = $region56
        $region55: #{tpu_custom_call.1} parent=39 // pred_region
          %290 = dma.done [#allocation9], 2048
        $region56: #{tpu_custom_call.1} parent=39 // pred_fallthru
          _
        // Predicated region
        $region57: #{tpu_custom_call.1} parent=39 // pred_check
          %p291 = pneg %p143
        $region58: #{tpu_custom_call.1} parent=39 // pred_check_branch
          %293 = sbr.rel (%p291) target = $region60
        $region59: #{tpu_custom_call.1} parent=39 // pred_region
          %294 = dma.done [#allocation9], 2048
        $region60: #{tpu_custom_call.1} parent=39 // pred_fallthru
          _
        %s295 = sand.u32 %s46, 1
        %s296 = scalar_lea.sflag [#allocation3], %s295
        %s297 = sand.u32 %s46, 1
        %s298 = smul.addr %s297, 8
        %s299 = scalar_lea.vmem [#allocation2], %s298
        %p300 = pneg %p59
        %p301 = pneg %p56
        %p302 = pneg %p80
        %p303 = pneg %p77
        %p304 = pneg %p101
        %p305 = pneg %p98
        %p306 = pneg %p122
        %p307 = pneg %p119
        %p308 = pneg %p143
        %p309 = pneg %p140
        %p310 = pneg %p171
        %p311 = pneg %p168
        %s312 = sand.u32 %s158, 1
        %s313 = scalar_lea.sflag [#allocation4], %s312
        %s314 = sand.u32 %s158, 1
        %s315 = smul.addr %s314, 256
        %s316 = scalar_lea.vmem [#allocation11], %s315
        %s317 = smul.u32 2, %s29
        %s318 = smul.u32 2, %s29
        %v319 = vld [vmem:[%s274] sm:$0xff]
        %v320 = vld [vmem:[#allocation5] sm:$0xff]
        %v321 = vld [vmem:[#allocation5 + $0x8] sm:$0xff]
        %v322 = vld [vmem:[#allocation5 + $0x10] sm:$0xff]
        %v323 = vld [vmem:[#allocation5 + $0x18] sm:$0xff]
        %v324 = vld [vmem:[#allocation5 + $0x20] sm:$0xff]
        %v325 = vld [vmem:[#allocation5 + $0x28] sm:$0xff]
        %v326 = vld [vmem:[#allocation5 + $0x30] sm:$0xff]
        %v327 = vld [vmem:[#allocation5 + $0x38] sm:$0xff]
        %v328 = vld [vmem:[#allocation5 + $0x40] sm:$0xff]
        %v329 = vld [vmem:[#allocation5 + $0x48] sm:$0xff]
        %v330 = vld [vmem:[#allocation5 + $0x50] sm:$0xff]
        %v331 = vld [vmem:[#allocation5 + $0x58] sm:$0xff]
        %v332 = vld [vmem:[#allocation5 + $0x60] sm:$0xff]
        %v333 = vld [vmem:[#allocation5 + $0x68] sm:$0xff]
        %v334 = vld [vmem:[#allocation5 + $0x70] sm:$0xff]
        %v335 = vld [vmem:[#allocation5 + $0x78] sm:$0xff]
        %v336 = vld [vmem:[#allocation7] sm:$0xff]
        %v337 = vld [vmem:[#allocation7 + $0x8] sm:$0xff]
        %v338 = vld [vmem:[#allocation7 + $0x10] sm:$0xff]
        %v339 = vld [vmem:[#allocation7 + $0x18] sm:$0xff]
        %v340 = vld [vmem:[#allocation7 + $0x20] sm:$0xff]
        %v341 = vld [vmem:[#allocation7 + $0x28] sm:$0xff]
        %v342 = vld [vmem:[#allocation7 + $0x30] sm:$0xff]
        %v343 = vld [vmem:[#allocation7 + $0x38] sm:$0xff]
        %v344 = vld [vmem:[#allocation7 + $0x40] sm:$0xff]
        %v345 = vld [vmem:[#allocation7 + $0x48] sm:$0xff]
        %v346 = vld [vmem:[#allocation7 + $0x50] sm:$0xff]
        %v347 = vld [vmem:[#allocation7 + $0x58] sm:$0xff]
        %v348 = vld [vmem:[#allocation7 + $0x60] sm:$0xff]
        %v349 = vld [vmem:[#allocation7 + $0x68] sm:$0xff]
        %v350 = vld [vmem:[#allocation7 + $0x70] sm:$0xff]
        %v351 = vld [vmem:[#allocation7 + $0x78] sm:$0xff]
        %353 = vset.pattern.permute.xlu0 0
        %354 = vperm.xlu0 %353, %v336
        %v355 = vpop.permute.xlu0 %354
        %358 = vset.pattern.permute.xlu0 0
        %359 = vperm.xlu0 %358, %v337
        %v360 = vpop.permute.xlu0 %359
        %363 = vset.pattern.permute.xlu0 0
        %364 = vperm.xlu0 %363, %v338
        %v365 = vpop.permute.xlu0 %364
        %368 = vset.pattern.permute.xlu0 0
        %369 = vperm.xlu0 %368, %v339
        %v370 = vpop.permute.xlu0 %369
        %373 = vset.pattern.permute.xlu0 0
        %374 = vperm.xlu0 %373, %v340
        %v375 = vpop.permute.xlu0 %374
        %378 = vset.pattern.permute.xlu0 0
        %379 = vperm.xlu0 %378, %v341
        %v380 = vpop.permute.xlu0 %379
        %383 = vset.pattern.permute.xlu0 0
        %384 = vperm.xlu0 %383, %v342
        %v385 = vpop.permute.xlu0 %384
        %388 = vset.pattern.permute.xlu0 0
        %389 = vperm.xlu0 %388, %v343
        %v390 = vpop.permute.xlu0 %389
        %393 = vset.pattern.permute.xlu0 0
        %394 = vperm.xlu0 %393, %v344
        %v395 = vpop.permute.xlu0 %394
        %398 = vset.pattern.permute.xlu0 0
        %399 = vperm.xlu0 %398, %v345
        %v400 = vpop.permute.xlu0 %399
        %403 = vset.pattern.permute.xlu0 0
        %404 = vperm.xlu0 %403, %v346
        %v405 = vpop.permute.xlu0 %404
        %408 = vset.pattern.permute.xlu0 0
        %409 = vperm.xlu0 %408, %v347
        %v410 = vpop.permute.xlu0 %409
        %413 = vset.pattern.permute.xlu0 0
        %414 = vperm.xlu0 %413, %v348
        %v415 = vpop.permute.xlu0 %414
        %418 = vset.pattern.permute.xlu0 0
        %419 = vperm.xlu0 %418, %v349
        %v420 = vpop.permute.xlu0 %419
        %423 = vset.pattern.permute.xlu0 0
        %424 = vperm.xlu0 %423, %v350
        %v425 = vpop.permute.xlu0 %424
        %428 = vset.pattern.permute.xlu0 0
        %429 = vperm.xlu0 %428, %v351
        %v430 = vpop.permute.xlu0 %429
        %v433 = vcombine.high %v319, %v319
        %vm434 = vcmask 31744
        %v436 = vsel %vm434, %v320, 0
        %v439 = vsel %vm434, %v321, 0
        %v442 = vsel %vm434, %v322, 0
        %v445 = vsel %vm434, %v323, 0
        %v448 = vsel %vm434, %v324, 0
        %v451 = vsel %vm434, %v325, 0
        %v454 = vsel %vm434, %v326, 0
        %v457 = vsel %vm434, %v327, 0
        %v460 = vsel %vm434, %v328, 0
        %v463 = vsel %vm434, %v329, 0
        %v466 = vsel %vm434, %v330, 0
        %v469 = vsel %vm434, %v331, 0
        %v472 = vsel %vm434, %v332, 0
        %v475 = vsel %vm434, %v333, 0
        %v478 = vsel %vm434, %v334, 0
        %v481 = vsel %vm434, %v335, 0
        %vm483 = vcmask 1043456
        %v484 = vsel %vm483, %v319, 0
        %v486 = vsel %vm483, %v433, 0
        %488 = vmatprep.subr.mxu0 %v486
        %489 = vmatpush1.msra.mxu0 %v484
        %490 = vmatprep.subr.mxu0 0.0
        %491 = vmatpush1.msra.mxu0 0.0
        %492 = vmatprep.subr.mxu0 0.0
        %493 = vmatpush1.msra.mxu0 0.0
        %494 = vmatprep.subr.mxu0 0.0
        %495 = vmatpush1.msra.mxu0 0.0
        %496 = vmatprep.subr.mxu0 0.0
        %497 = vmatpush1.msra.mxu0 0.0
        %498 = vmatprep.subr.mxu0 0.0
        %499 = vmatpush1.msra.mxu0 0.0
        %500 = vmatprep.subr.mxu0 0.0
        %501 = vmatpush1.msra.mxu0 0.0
        %502 = vmatprep.subr.mxu0 0.0
        %503 = vmatpush1.msra.mxu0 0.0
        %504 = vmatprep.subr.mxu0 0.0
        %505 = vmatpush1.msra.mxu0 0.0
        %506 = vmatprep.subr.mxu0 0.0
        %507 = vmatpush1.msra.mxu0 0.0
        %508 = vmatprep.subr.mxu0 0.0
        %509 = vmatpush1.msra.mxu0 0.0
        %510 = vmatprep.subr.mxu0 0.0
        %511 = vmatpush1.msra.mxu0 0.0
        %512 = vmatprep.subr.mxu0 0.0
        %513 = vmatpush1.msra.mxu0 0.0
        %514 = vmatprep.subr.mxu0 0.0
        %515 = vmatpush1.msra.mxu0 0.0
        %516 = vmatprep.subr.mxu0 0.0
        %517 = vmatpush1.msra.mxu0 0.0
        %518 = vmatprep.subr.mxu0 0.0
        %519 = vmatpush1.msra.mxu0 0.0
        %520 = vmatprep.subr.mxu0 0.0
        %521 = vmatpush1.msra.mxu0 0.0
        %522 = vmatprep.subr.mxu0 0.0
        %523 = vmatpush1.msra.mxu0 0.0
        %524 = vmatprep.subr.mxu0 0.0
        %525 = vmatpush1.msra.mxu0 0.0
        %526 = vmatprep.subr.mxu0 0.0
        %527 = vmatpush1.msra.mxu0 0.0
        %528 = vmatprep.subr.mxu0 0.0
        %529 = vmatpush1.msra.mxu0 0.0
        %530 = vmatprep.subr.mxu0 0.0
        %531 = vmatpush1.msra.mxu0 0.0
        %532 = vmatprep.subr.mxu0 0.0
        %533 = vmatpush1.msra.mxu0 0.0
        %534 = vmatprep.subr.mxu0 0.0
        %535 = vmatpush1.msra.mxu0 0.0
        %536 = vmatprep.subr.mxu0 0.0
        %537 = vmatpush1.msra.mxu0 0.0
        %538 = vmatprep.subr.mxu0 0.0
        %539 = vmatpush1.msra.mxu0 0.0
        %540 = vmatprep.subr.mxu0 0.0
        %541 = vmatpush1.msra.mxu0 0.0
        %542 = vmatprep.subr.mxu0 0.0
        %543 = vmatpush1.msra.mxu0 0.0
        %544 = vmatprep.subr.mxu0 0.0
        %545 = vmatpush1.msra.mxu0 0.0
        %546 = vmatprep.subr.mxu0 0.0
        %547 = vmatpush1.msra.mxu0 0.0
        %548 = vmatprep.subr.mxu0 0.0
        %549 = vmatpush1.msra.mxu0 0.0
        %550 = vmatprep.subr.mxu0 0.0
        %551 = vmatpush1.msra.mxu0 0.0
        %552 = vmatprep.mubr.f32.mxu0 0.0
        %553 = vmatmul.mubr.f32.gmra.mrb[0].mxu0 %v436
        %v554 = vpop.f32.mrb[0].mxu0
        %v555 = vadd.f32 %v355, %v554
        %v556 = vpop.f32.mrb[0].mxu0
        %v557 = vadd.f32 %v355, %v556
        %558 = vmatprep.mubr.f32.mxu0 0.0
        %559 = vmatmul.mubr.f32.gmra.mrb[0].mxu0 %v439
        %v560 = vpop.f32.mrb[0].mxu0
        %v561 = vadd.f32 %v360, %v560
        %v562 = vpop.f32.mrb[0].mxu0
        %v563 = vadd.f32 %v360, %v562
        %564 = vmatprep.mubr.f32.mxu0 0.0
        %565 = vmatmul.mubr.f32.gmra.mrb[0].mxu0 %v442
        %v566 = vpop.f32.mrb[0].mxu0
        %v567 = vadd.f32 %v365, %v566
        %v568 = vpop.f32.mrb[0].mxu0
        %v569 = vadd.f32 %v365, %v568
        %570 = vmatprep.mubr.f32.mxu0 0.0
        %571 = vmatmul.mubr.f32.gmra.mrb[0].mxu0 %v445
        %v572 = vpop.f32.mrb[0].mxu0
        %v573 = vadd.f32 %v370, %v572
        %v574 = vpop.f32.mrb[0].mxu0
        %v575 = vadd.f32 %v370, %v574
        %576 = vmatprep.mubr.f32.mxu0 0.0
        %577 = vmatmul.mubr.f32.gmra.mrb[0].mxu0 %v448
        %v578 = vpop.f32.mrb[0].mxu0
        %v579 = vadd.f32 %v375, %v578
        %v580 = vpop.f32.mrb[0].mxu0
        %v581 = vadd.f32 %v375, %v580
        %582 = vmatprep.mubr.f32.mxu0 0.0
        %583 = vmatmul.mubr.f32.gmra.mrb[0].mxu0 %v451
        %v584 = vpop.f32.mrb[0].mxu0
        %v585 = vadd.f32 %v380, %v584
        %v586 = vpop.f32.mrb[0].mxu0
        %v587 = vadd.f32 %v380, %v586
        %588 = vmatprep.mubr.f32.mxu0 0.0
        %589 = vmatmul.mubr.f32.gmra.mrb[0].mxu0 %v454
        %v590 = vpop.f32.mrb[0].mxu0
        %v591 = vadd.f32 %v385, %v590
        %v592 = vpop.f32.mrb[0].mxu0
        %v593 = vadd.f32 %v385, %v592
        %594 = vmatprep.mubr.f32.mxu0 0.0
        %595 = vmatmul.mubr.f32.gmra.mrb[0].mxu0 %v457
        %v596 = vpop.f32.mrb[0].mxu0
        %v597 = vadd.f32 %v390, %v596
        %v598 = vpop.f32.mrb[0].mxu0
        %v599 = vadd.f32 %v390, %v598
        %600 = vmatprep.mubr.f32.mxu0 0.0
        %601 = vmatmul.mubr.f32.gmra.mrb[0].mxu0 %v460
        %v602 = vpop.f32.mrb[0].mxu0
        %v603 = vadd.f32 %v395, %v602
        %v604 = vpop.f32.mrb[0].mxu0
        %v605 = vadd.f32 %v395, %v604
        %606 = vmatprep.mubr.f32.mxu0 0.0
        %607 = vmatmul.mubr.f32.gmra.mrb[0].mxu0 %v463
        %v608 = vpop.f32.mrb[0].mxu0
        %v609 = vadd.f32 %v400, %v608
        %v610 = vpop.f32.mrb[0].mxu0
        %v611 = vadd.f32 %v400, %v610
        %612 = vmatprep.mubr.f32.mxu0 0.0
        %613 = vmatmul.mubr.f32.gmra.mrb[0].mxu0 %v466
        %v614 = vpop.f32.mrb[0].mxu0
        %v615 = vadd.f32 %v405, %v614
        %v616 = vpop.f32.mrb[0].mxu0
        %v617 = vadd.f32 %v405, %v616
        %618 = vmatprep.mubr.f32.mxu0 0.0
        %619 = vmatmul.mubr.f32.gmra.mrb[0].mxu0 %v469
        %v620 = vpop.f32.mrb[0].mxu0
        %v621 = vadd.f32 %v410, %v620
        %v622 = vpop.f32.mrb[0].mxu0
        %v623 = vadd.f32 %v410, %v622
        %624 = vmatprep.mubr.f32.mxu0 0.0
        %625 = vmatmul.mubr.f32.gmra.mrb[0].mxu0 %v472
        %v626 = vpop.f32.mrb[0].mxu0
        %v627 = vadd.f32 %v415, %v626
        %v628 = vpop.f32.mrb[0].mxu0
        %v629 = vadd.f32 %v415, %v628
        %630 = vmatprep.mubr.f32.mxu0 0.0
        %631 = vmatmul.mubr.f32.gmra.mrb[0].mxu0 %v475
        %v632 = vpop.f32.mrb[0].mxu0
        %v633 = vadd.f32 %v420, %v632
        %v634 = vpop.f32.mrb[0].mxu0
        %v635 = vadd.f32 %v420, %v634
        %636 = vmatprep.mubr.f32.mxu0 0.0
        %637 = vmatmul.mubr.f32.gmra.mrb[0].mxu0 %v478
        %v638 = vpop.f32.mrb[0].mxu0
        %v639 = vadd.f32 %v425, %v638
        %v640 = vpop.f32.mrb[0].mxu0
        %v641 = vadd.f32 %v425, %v640
        %642 = vmatprep.mubr.f32.mxu0 0.0
        %643 = vmatmul.mubr.f32.gmra.mrb[0].mxu0 %v481
        %v644 = vpop.f32.mrb[0].mxu0
        %v645 = vadd.f32 %v430, %v644
        %v646 = vpop.f32.mrb[0].mxu0
        %v647 = vadd.f32 %v430, %v646
        %648 = vdwg.mxu0
        %v649 = vmax.f32 %v555, 0.0
        %v650 = vmax.f32 %v557, 0.0
        %v651 = vmax.f32 %v561, 0.0
        %v652 = vmax.f32 %v563, 0.0
        %v653 = vmax.f32 %v567, 0.0
        %v654 = vmax.f32 %v569, 0.0
        %v655 = vmax.f32 %v573, 0.0
        %v656 = vmax.f32 %v575, 0.0
        %v657 = vmax.f32 %v579, 0.0
        %v658 = vmax.f32 %v581, 0.0
        %v659 = vmax.f32 %v585, 0.0
        %v660 = vmax.f32 %v587, 0.0
        %v661 = vmax.f32 %v591, 0.0
        %v662 = vmax.f32 %v593, 0.0
        %v663 = vmax.f32 %v597, 0.0
        %v664 = vmax.f32 %v599, 0.0
        %v665 = vmax.f32 %v603, 0.0
        %v666 = vmax.f32 %v605, 0.0
        %v667 = vmax.f32 %v609, 0.0
        %v668 = vmax.f32 %v611, 0.0
        %v669 = vmax.f32 %v615, 0.0
        %v670 = vmax.f32 %v617, 0.0
        %v671 = vmax.f32 %v621, 0.0
        %v672 = vmax.f32 %v623, 0.0
        %v673 = vmax.f32 %v627, 0.0
        %v674 = vmax.f32 %v629, 0.0
        %v675 = vmax.f32 %v633, 0.0
        %v676 = vmax.f32 %v635, 0.0
        %v677 = vmax.f32 %v639, 0.0
        %v678 = vmax.f32 %v641, 0.0
        %v679 = vmax.f32 %v645, 0.0
        %v680 = vmax.f32 %v647, 0.0
        %v681 = vld [vmem:[#allocation8] sm:$0xff]
        %v682 = vld [vmem:[#allocation8 + $0x8] sm:$0xff]
        %v683 = vld [vmem:[#allocation8 + $0x10] sm:$0xff]
        %v684 = vld [vmem:[#allocation8 + $0x18] sm:$0xff]
        %v685 = vld [vmem:[#allocation8 + $0x20] sm:$0xff]
        %v686 = vld [vmem:[#allocation8 + $0x28] sm:$0xff]
        %v687 = vld [vmem:[#allocation8 + $0x30] sm:$0xff]
        %v688 = vld [vmem:[#allocation8 + $0x38] sm:$0xff]
        %v689 = vld [vmem:[#allocation8 + $0x40] sm:$0xff]
        %v690 = vld [vmem:[#allocation8 + $0x48] sm:$0xff]
        %v691 = vld [vmem:[#allocation8 + $0x50] sm:$0xff]
        %v692 = vld [vmem:[#allocation8 + $0x58] sm:$0xff]
        %v693 = vld [vmem:[#allocation8 + $0x60] sm:$0xff]
        %v694 = vld [vmem:[#allocation8 + $0x68] sm:$0xff]
        %v695 = vld [vmem:[#allocation8 + $0x70] sm:$0xff]
        %v696 = vld [vmem:[#allocation8 + $0x78] sm:$0xff]
        %v697 = vld [vmem:[#allocation10] sm:$0xff]
        %v698 = vld [vmem:[#allocation10 + $0x8] sm:$0xff]
        %v699 = vld [vmem:[#allocation10 + $0x10] sm:$0xff]
        %v700 = vld [vmem:[#allocation10 + $0x18] sm:$0xff]
        %v701 = vld [vmem:[#allocation10 + $0x20] sm:$0xff]
        %v702 = vld [vmem:[#allocation10 + $0x28] sm:$0xff]
        %v703 = vld [vmem:[#allocation10 + $0x30] sm:$0xff]
        %v704 = vld [vmem:[#allocation10 + $0x38] sm:$0xff]
        %v705 = vld [vmem:[#allocation10 + $0x40] sm:$0xff]
        %v706 = vld [vmem:[#allocation10 + $0x48] sm:$0xff]
        %v707 = vld [vmem:[#allocation10 + $0x50] sm:$0xff]
        %v708 = vld [vmem:[#allocation10 + $0x58] sm:$0xff]
        %v709 = vld [vmem:[#allocation10 + $0x60] sm:$0xff]
        %v710 = vld [vmem:[#allocation10 + $0x68] sm:$0xff]
        %v711 = vld [vmem:[#allocation10 + $0x70] sm:$0xff]
        %v712 = vld [vmem:[#allocation10 + $0x78] sm:$0xff]
        %714 = vset.pattern.permute.xlu0 0
        %715 = vperm.xlu0 %714, %v697
        %v716 = vpop.permute.xlu0 %715
        %719 = vset.pattern.permute.xlu0 0
        %720 = vperm.xlu0 %719, %v698
        %v721 = vpop.permute.xlu0 %720
        %724 = vset.pattern.permute.xlu0 0
        %725 = vperm.xlu0 %724, %v699
        %v726 = vpop.permute.xlu0 %725
        %729 = vset.pattern.permute.xlu0 0
        %730 = vperm.xlu0 %729, %v700
        %v731 = vpop.permute.xlu0 %730
        %734 = vset.pattern.permute.xlu0 0
        %735 = vperm.xlu0 %734, %v701
        %v736 = vpop.permute.xlu0 %735
        %739 = vset.pattern.permute.xlu0 0
        %740 = vperm.xlu0 %739, %v702
        %v741 = vpop.permute.xlu0 %740
        %744 = vset.pattern.permute.xlu0 0
        %745 = vperm.xlu0 %744, %v703
        %v746 = vpop.permute.xlu0 %745
        %749 = vset.pattern.permute.xlu0 0
        %750 = vperm.xlu0 %749, %v704
        %v751 = vpop.permute.xlu0 %750
        %754 = vset.pattern.permute.xlu0 0
        %755 = vperm.xlu0 %754, %v705
        %v756 = vpop.permute.xlu0 %755
        %759 = vset.pattern.permute.xlu0 0
        %760 = vperm.xlu0 %759, %v706
        %v761 = vpop.permute.xlu0 %760
        %764 = vset.pattern.permute.xlu0 0
        %765 = vperm.xlu0 %764, %v707
        %v766 = vpop.permute.xlu0 %765
        %769 = vset.pattern.permute.xlu0 0
        %770 = vperm.xlu0 %769, %v708
        %v771 = vpop.permute.xlu0 %770
        %774 = vset.pattern.permute.xlu0 0
        %775 = vperm.xlu0 %774, %v709
        %v776 = vpop.permute.xlu0 %775
        %779 = vset.pattern.permute.xlu0 0
        %780 = vperm.xlu0 %779, %v710
        %v781 = vpop.permute.xlu0 %780
        %784 = vset.pattern.permute.xlu0 0
        %785 = vperm.xlu0 %784, %v711
        %v786 = vpop.permute.xlu0 %785
        %789 = vset.pattern.permute.xlu0 0
        %790 = vperm.xlu0 %789, %v712
        %v791 = vpop.permute.xlu0 %790
        %793 = vmatprep.subr.mxu0 %v650
        %794 = vmatpush1.msra.mxu0 %v649
        %795 = vmatprep.subr.mxu0 %v652
        %796 = vmatpush1.msra.mxu0 %v651
        %797 = vmatprep.subr.mxu0 %v654
        %798 = vmatpush1.msra.mxu0 %v653
        %799 = vmatprep.subr.mxu0 %v656
        %800 = vmatpush1.msra.mxu0 %v655
        %801 = vmatprep.subr.mxu0 %v658
        %802 = vmatpush1.msra.mxu0 %v657
        %803 = vmatprep.subr.mxu0 %v660
        %804 = vmatpush1.msra.mxu0 %v659
        %805 = vmatprep.subr.mxu0 %v662
        %806 = vmatpush1.msra.mxu0 %v661
        %807 = vmatprep.subr.mxu0 %v664
        %808 = vmatpush1.msra.mxu0 %v663
        %809 = vmatprep.subr.mxu0 %v666
        %810 = vmatpush1.msra.mxu0 %v665
        %811 = vmatprep.subr.mxu0 %v668
        %812 = vmatpush1.msra.mxu0 %v667
        %813 = vmatprep.subr.mxu0 %v670
        %814 = vmatpush1.msra.mxu0 %v669
        %815 = vmatprep.subr.mxu0 %v672
        %816 = vmatpush1.msra.mxu0 %v671
        %817 = vmatprep.subr.mxu0 %v674
        %818 = vmatpush1.msra.mxu0 %v673
        %819 = vmatprep.subr.mxu0 %v676
        %820 = vmatpush1.msra.mxu0 %v675
        %821 = vmatprep.subr.mxu0 %v678
        %822 = vmatpush1.msra.mxu0 %v677
        %823 = vmatprep.subr.mxu0 %v680
        %824 = vmatpush1.msra.mxu0 %v679
        %825 = vmatprep.subr.mxu0 0.0
        %826 = vmatpush1.msra.mxu0 0.0
        %827 = vmatprep.subr.mxu0 0.0
        %828 = vmatpush1.msra.mxu0 0.0
        %829 = vmatprep.subr.mxu0 0.0
        %830 = vmatpush1.msra.mxu0 0.0
        %831 = vmatprep.subr.mxu0 0.0
        %832 = vmatpush1.msra.mxu0 0.0
        %833 = vmatprep.subr.mxu0 0.0
        %834 = vmatpush1.msra.mxu0 0.0
        %835 = vmatprep.subr.mxu0 0.0
        %836 = vmatpush1.msra.mxu0 0.0
        %837 = vmatprep.subr.mxu0 0.0
        %838 = vmatpush1.msra.mxu0 0.0
        %839 = vmatprep.subr.mxu0 0.0
        %840 = vmatpush1.msra.mxu0 0.0
        %841 = vmatprep.subr.mxu0 0.0
        %842 = vmatpush1.msra.mxu0 0.0
        %843 = vmatprep.subr.mxu0 0.0
        %844 = vmatpush1.msra.mxu0 0.0
        %845 = vmatprep.subr.mxu0 0.0
        %846 = vmatpush1.msra.mxu0 0.0
        %847 = vmatprep.subr.mxu0 0.0
        %848 = vmatpush1.msra.mxu0 0.0
        %849 = vmatprep.subr.mxu0 0.0
        %850 = vmatpush1.msra.mxu0 0.0
        %851 = vmatprep.subr.mxu0 0.0
        %852 = vmatpush1.msra.mxu0 0.0
        %853 = vmatprep.subr.mxu0 0.0
        %854 = vmatpush1.msra.mxu0 0.0
        %855 = vmatprep.subr.mxu0 0.0
        %856 = vmatpush1.msra.mxu0 0.0
        %857 = vmatprep.mubr.f32.mxu0 0.0
        %858 = vmatmul.mubr.f32.gmra.mrb[0].mxu0 %v681
        %v859 = vpop.f32.mrb[0].mxu0
        %v860 = vadd.f32 %v716, %v859
        %v861 = vpop.f32.mrb[0].mxu0
        %v862 = vadd.f32 %v716, %v861
        %863 = vmatprep.mubr.f32.mxu0 0.0
        %864 = vmatmul.mubr.f32.gmra.mrb[0].mxu0 %v682
        %v865 = vpop.f32.mrb[0].mxu0
        %v866 = vadd.f32 %v721, %v865
        %v867 = vpop.f32.mrb[0].mxu0
        %v868 = vadd.f32 %v721, %v867
        %869 = vmatprep.mubr.f32.mxu0 0.0
        %870 = vmatmul.mubr.f32.gmra.mrb[0].mxu0 %v683
        %v871 = vpop.f32.mrb[0].mxu0
        %v872 = vadd.f32 %v726, %v871
        %v873 = vpop.f32.mrb[0].mxu0
        %v874 = vadd.f32 %v726, %v873
        %875 = vmatprep.mubr.f32.mxu0 0.0
        %876 = vmatmul.mubr.f32.gmra.mrb[0].mxu0 %v684
        %v877 = vpop.f32.mrb[0].mxu0
        %v878 = vadd.f32 %v731, %v877
        %v879 = vpop.f32.mrb[0].mxu0
        %v880 = vadd.f32 %v731, %v879
        %881 = vmatprep.mubr.f32.mxu0 0.0
        %882 = vmatmul.mubr.f32.gmra.mrb[0].mxu0 %v685
        %v883 = vpop.f32.mrb[0].mxu0
        %v884 = vadd.f32 %v736, %v883
        %v885 = vpop.f32.mrb[0].mxu0
        %v886 = vadd.f32 %v736, %v885
        %887 = vmatprep.mubr.f32.mxu0 0.0
        %888 = vmatmul.mubr.f32.gmra.mrb[0].mxu0 %v686
        %v889 = vpop.f32.mrb[0].mxu0
        %v890 = vadd.f32 %v741, %v889
        %v891 = vpop.f32.mrb[0].mxu0
        %v892 = vadd.f32 %v741, %v891
        %893 = vmatprep.mubr.f32.mxu0 0.0
        %894 = vmatmul.mubr.f32.gmra.mrb[0].mxu0 %v687
        %v895 = vpop.f32.mrb[0].mxu0
        %v896 = vadd.f32 %v746, %v895
        %v897 = vpop.f32.mrb[0].mxu0
        %v898 = vadd.f32 %v746, %v897
        %899 = vmatprep.mubr.f32.mxu0 0.0
        %900 = vmatmul.mubr.f32.gmra.mrb[0].mxu0 %v688
        %v901 = vpop.f32.mrb[0].mxu0
        %v902 = vadd.f32 %v751, %v901
        %v903 = vpop.f32.mrb[0].mxu0
        %v904 = vadd.f32 %v751, %v903
        %905 = vmatprep.mubr.f32.mxu0 0.0
        %906 = vmatmul.mubr.f32.gmra.mrb[0].mxu0 %v689
        %v907 = vpop.f32.mrb[0].mxu0
        %v908 = vadd.f32 %v756, %v907
        %v909 = vpop.f32.mrb[0].mxu0
        %v910 = vadd.f32 %v756, %v909
        %911 = vmatprep.mubr.f32.mxu0 0.0
        %912 = vmatmul.mubr.f32.gmra.mrb[0].mxu0 %v690
        %v913 = vpop.f32.mrb[0].mxu0
        %v914 = vadd.f32 %v761, %v913
        %v915 = vpop.f32.mrb[0].mxu0
        %v916 = vadd.f32 %v761, %v915
        %917 = vmatprep.mubr.f32.mxu0 0.0
        %918 = vmatmul.mubr.f32.gmra.mrb[0].mxu0 %v691
        %v919 = vpop.f32.mrb[0].mxu0
        %v920 = vadd.f32 %v766, %v919
        %v921 = vpop.f32.mrb[0].mxu0
        %v922 = vadd.f32 %v766, %v921
        %923 = vmatprep.mubr.f32.mxu0 0.0
        %924 = vmatmul.mubr.f32.gmra.mrb[0].mxu0 %v692
        %v925 = vpop.f32.mrb[0].mxu0
        %v926 = vadd.f32 %v771, %v925
        %v927 = vpop.f32.mrb[0].mxu0
        %v928 = vadd.f32 %v771, %v927
        %929 = vmatprep.mubr.f32.mxu0 0.0
        %930 = vmatmul.mubr.f32.gmra.mrb[0].mxu0 %v693
        %v931 = vpop.f32.mrb[0].mxu0
        %v932 = vadd.f32 %v776, %v931
        %v933 = vpop.f32.mrb[0].mxu0
        %v934 = vadd.f32 %v776, %v933
        %935 = vmatprep.mubr.f32.mxu0 0.0
        %936 = vmatmul.mubr.f32.gmra.mrb[0].mxu0 %v694
        %v937 = vpop.f32.mrb[0].mxu0
        %v938 = vadd.f32 %v781, %v937
        %v939 = vpop.f32.mrb[0].mxu0
        %v940 = vadd.f32 %v781, %v939
        %941 = vmatprep.mubr.f32.mxu0 0.0
        %942 = vmatmul.mubr.f32.gmra.mrb[0].mxu0 %v695
        %v943 = vpop.f32.mrb[0].mxu0
        %v944 = vadd.f32 %v786, %v943
        %v945 = vpop.f32.mrb[0].mxu0
        %v946 = vadd.f32 %v786, %v945
        %947 = vmatprep.mubr.f32.mxu0 0.0
        %948 = vmatmul.mubr.f32.gmra.mrb[0].mxu0 %v696
        %v949 = vpop.f32.mrb[0].mxu0
        %v950 = vadd.f32 %v791, %v949
        %v951 = vpop.f32.mrb[0].mxu0
        %v952 = vadd.f32 %v791, %v951
        %953 = vdwg.mxu0
        %v954 = vmax.f32 %v860, 0.0
        %v955 = vmax.f32 %v862, 0.0
        %v956 = vmax.f32 %v866, 0.0
        %v957 = vmax.f32 %v868, 0.0
        %v958 = vmax.f32 %v872, 0.0
        %v959 = vmax.f32 %v874, 0.0
        %v960 = vmax.f32 %v878, 0.0
        %v961 = vmax.f32 %v880, 0.0
        %v962 = vmax.f32 %v884, 0.0
        %v963 = vmax.f32 %v886, 0.0
        %v964 = vmax.f32 %v890, 0.0
        %v965 = vmax.f32 %v892, 0.0
        %v966 = vmax.f32 %v896, 0.0
        %v967 = vmax.f32 %v898, 0.0
        %v968 = vmax.f32 %v902, 0.0
        %v969 = vmax.f32 %v904, 0.0
        %v970 = vmax.f32 %v908, 0.0
        %v971 = vmax.f32 %v910, 0.0
        %v972 = vmax.f32 %v914, 0.0
        %v973 = vmax.f32 %v916, 0.0
        %v974 = vmax.f32 %v920, 0.0
        %v975 = vmax.f32 %v922, 0.0
        %v976 = vmax.f32 %v926, 0.0
        %v977 = vmax.f32 %v928, 0.0
        %v978 = vmax.f32 %v932, 0.0
        %v979 = vmax.f32 %v934, 0.0
        %v980 = vmax.f32 %v938, 0.0
        %v981 = vmax.f32 %v940, 0.0
        %v982 = vmax.f32 %v944, 0.0
        %v983 = vmax.f32 %v946, 0.0
        %v984 = vmax.f32 %v950, 0.0
        %v985 = vmax.f32 %v952, 0.0
        %986 = vst [vmem:[%s316] sm:$0xff] %v954
        %987 = vst [vmem:[%s316 + $0x8] sm:$0xff] %v955
        %988 = vst [vmem:[%s316 + $0x10] sm:$0xff] %v956
        %989 = vst [vmem:[%s316 + $0x18] sm:$0xff] %v957
        %990 = vst [vmem:[%s316 + $0x20] sm:$0xff] %v958
        %991 = vst [vmem:[%s316 + $0x28] sm:$0xff] %v959
        %992 = vst [vmem:[%s316 + $0x30] sm:$0xff] %v960
        %993 = vst [vmem:[%s316 + $0x38] sm:$0xff] %v961
        %994 = vst [vmem:[%s316 + $0x40] sm:$0xff] %v962
        %995 = vst [vmem:[%s316 + $0x48] sm:$0xff] %v963
        %996 = vst [vmem:[%s316 + $0x50] sm:$0xff] %v964
        %997 = vst [vmem:[%s316 + $0x58] sm:$0xff] %v965
        %998 = vst [vmem:[%s316 + $0x60] sm:$0xff] %v966
        %999 = vst [vmem:[%s316 + $0x68] sm:$0xff] %v967
        %1000 = vst [vmem:[%s316 + $0x70] sm:$0xff] %v968
        %1001 = vst [vmem:[%s316 + $0x78] sm:$0xff] %v969
        %1002 = vst [vmem:[%s316 + $0x80] sm:$0xff] %v970
        %1003 = vst [vmem:[%s316 + $0x88] sm:$0xff] %v971
        %1004 = vst [vmem:[%s316 + $0x90] sm:$0xff] %v972
        %1005 = vst [vmem:[%s316 + $0x98] sm:$0xff] %v973
        %1006 = vst [vmem:[%s316 + $0xa0] sm:$0xff] %v974
        %1007 = vst [vmem:[%s316 + $0xa8] sm:$0xff] %v975
        %1008 = vst [vmem:[%s316 + $0xb0] sm:$0xff] %v976
        %1009 = vst [vmem:[%s316 + $0xb8] sm:$0xff] %v977
        %1010 = vst [vmem:[%s316 + $0xc0] sm:$0xff] %v978
        %1011 = vst [vmem:[%s316 + $0xc8] sm:$0xff] %v979
        %1012 = vst [vmem:[%s316 + $0xd0] sm:$0xff] %v980
        %1013 = vst [vmem:[%s316 + $0xd8] sm:$0xff] %v981
        %1014 = vst [vmem:[%s316 + $0xe0] sm:$0xff] %v982
        %1015 = vst [vmem:[%s316 + $0xe8] sm:$0xff] %v983
        %1016 = vst [vmem:[%s316 + $0xf0] sm:$0xff] %v984
        %1017 = vst [vmem:[%s316 + $0xf8] sm:$0xff] %v985
        %s1018 = sand.u32 %s158, 1
        %s1019 = scalar_lea.sflag [#allocation4], %s1018
        %s1020 = sand.u32 %s158, 1
        %s1021 = smul.addr %s1020, 256
        %s1022 = scalar_lea.vmem [#allocation11], %s1021
        // Predicated region
        $region61: #{tpu_custom_call.1} parent=39 // pred_check
          %p1023 = pneg %p168
        $region62: #{tpu_custom_call.1} parent=39 // pred_check_branch
          %1025 = sbr.rel (%p1023) target = $region64
        $region63: #{tpu_custom_call.1} parent=39 // pred_region
          %s1026 = smul.u32 2, %s29
          %s1028 = ssub.s32 4096, 4096
          %1029 = vsyncadd %s1019, %s1028
          %s1030 = smul.addr %s28, 32
          %s1031 = sadd.s32 %s1026, %s1030
          %s1032 = smul.addr %s1031, 128
          %s1033 = scalar_lea.hbm %s5, %s1032
          %s1034 = sshll.u32 %s1022, 4
          %s1035 = int_to_ptr.vmem [resolvable:$true] %s1034
          %1040 = dma.vmem_to_hbm [thread:$0]  %s1035, 4096, %s1033, %s1019, 256, 256, 16
        $region64: #{tpu_custom_call.1} parent=39 // pred_fallthru
          _
      $region40: #{tpu_custom_call.1} parent=5 // pred_fallthru
        _
      %p1041 = scmp.le.s32.totalorder 2, %s19
      // Predicated region
      $region65: #{tpu_custom_call.1} parent=5 // pred_check
        %p1042 = pneg %p1041
      $region66: #{tpu_custom_call.1} parent=5 // pred_check_branch
        %1044 = sbr.rel (%p1042) target = $region68
      $region67: #{tpu_custom_call.1} parent=5 // pred_region
        %s1045 = ssub.s32 %s19, 2
        // Predicated region
        $region69: #{tpu_custom_call.1} parent=67 // pred_check
          %p1046 = pneg %p174
        $region70: #{tpu_custom_call.1} parent=67 // pred_check_branch
          %1048 = sbr.rel (%p1046) target = $region72
        $region71: #{tpu_custom_call.1} parent=67 // pred_region
          %s1049 = sand.u32 %s159, 1
          %s1050 = scalar_lea.sflag [#allocation4], %s1049
          %s1051 = sand.u32 %s159, 1
          %s1052 = smul.addr %s1051, 256
          %s1053 = scalar_lea.vmem [#allocation11], %s1052
          %1054 = dma.done %s1050, 4096
        $region72: #{tpu_custom_call.1} parent=67 // pred_fallthru
          _
      $region68: #{tpu_custom_call.1} parent=5 // pred_fallthru
        _
    $region6: #{tpu_custom_call.1} parent=1 // loop_footer
      %s23 = sadd.s32 1, %s19
    $region7: #{tpu_custom_call.1} parent=1 // loop_footer_branch
      %18 = sbr.rel target = $region3
    $region8: #{tpu_custom_call.1} parent=1 // loop_exit
      _
    %1055 = vsyncpa [#allocation3], 1
    %s1056 = scalar_lea.sflag [#allocation3], 1
    %1057 = vsyncpa %s1056, 1
    %1058 = vsyncpa [#allocation6], 1
    %1059 = vsyncpa [#allocation9], 1
    %1060 = vsyncpa [#allocation4], 1
    %s1061 = scalar_lea.sflag [#allocation4], 1
    %1062 = vsyncpa %s1061, 1

</llo_original>
